<compile_context>
chip_gen: v7x
topology: tpu7x:2x2x1
jax: 0.10.0
libtpu: 0.0.40
codegen_flags: <defaults>
</compile_context>

<pallas_src>
import functools

import jax
import jax.numpy as jnp
from jax.experimental import pallas as pl
from jax.experimental.pallas import tpu as pltpu


_LANES = 128                       # TPU vreg lane width
_WIDTH = 4 * _LANES                # lane-dense slab width (512) -> unmasked stores
_MAX_TILE_ROWS = 1024              # (1024, 512) f32 block = 2 MiB per buffer
_MIN_PALLAS_ELEMS = 64 * _WIDTH    # below ~128 KiB, XLA fusion is already at roofline


def _activation_f32(y, act_type):
    """Activation in float32. Shared by the kernel and the XLA tail/fallback."""
    if act_type == "sigmoid":
        # sigmoid(y) = 0.5 * (tanh(y/2) + 1): one EUP transcendental, no f32
        # divide (Newton-Raphson VPU sequence), and accurate to a few ULP.
        return 0.5 * (jnp.tanh(0.5 * y) + 1.0)
    if act_type == "tanh":
        return jnp.tanh(y)
    # 'adaline' (Identity) and any other value: no activation applied.
    return y


def _forward_xla(x, w, act_type):
    """Plain-XLA path (tiny inputs and the <512-element ragged tail)."""
    y = x.astype(jnp.float32) * w[0, 0].astype(jnp.float32)
    return _activation_f32(y, act_type).astype(x.dtype)


def _nn_model_kernel(w_ref, x_ref, o_ref, *, act_type):
    # Linear(1, 1, bias=False): y = x @ W^T == x * W[0, 0]  (W is 1x1, in SMEM).
    w = w_ref[0, 0].astype(jnp.float32)
    y = x_ref[...].astype(jnp.float32) * w      # f32 math (v5e: no bf16 VPU/EUP)
    o_ref[...] = _activation_f32(y, act_type).astype(o_ref.dtype)


def _round_up(n, m):
    return ((n + m - 1) // m) * m


def nn_model_forward(x, w, act_type="adaline"):
    """Forward pass of NNModel.

    x: (..., 1) float array (any leading batch shape), matching nn.Linear(1, 1).
    w: (1, 1) float array -- nn.Linear(1, 1, bias=False) weight.
    """
    orig_shape = x.shape
    n = x.size

    # Tiny inputs: let XLA fuse the scalar multiply + activation for free.
    if n < _MIN_PALLAS_ELEMS:
        return _forward_xla(x, w, act_type)

    flat = x.reshape(-1)                    # (..., 1) -> (n,): free view
    main_n = (n // _WIDTH) * _WIDTH         # largest multiple of the slab width
    rem = n - main_n
    rows = main_n // _WIDTH

    # Lane-dense slab over the aligned prefix; no padding of the input.
    main = flat if rem == 0 else flat[:main_n]
    slab = main.reshape(rows, _WIDTH)

    # Tile rows: cap at 2 MiB blocks, but guarantee >= 2 grid steps so both of
    # v7x's TensorCores get work (harmless on v5e/v6e).
    if rows >= 16:
        tile_rows = min(_MAX_TILE_ROWS, _round_up(pl.cdiv(rows, 2), 8))
    else:
        tile_rows = rows                    # single full-extent block
    grid = (pl.cdiv(rows, tile_rows),)      # ragged last block handled by Pallas

    kernel = functools.partial(_nn_model_kernel, act_type=act_type)
    main_out = pl.pallas_call(
        kernel,
        out_shape=jax.ShapeDtypeStruct((rows, _WIDTH), x.dtype),
        grid=grid,
        in_specs=[
            # (1, 1) weight as an SMEM scalar: no padded VMEM tile, no per-step DMA.
            pl.BlockSpec(memory_space=pltpu.MemorySpace.SMEM),
            # Input slab tiled over rows; BlockSpec auto double-buffers the DMA.
            pl.BlockSpec((tile_rows, _WIDTH), lambda i: (i, 0)),
        ],
        out_specs=pl.BlockSpec((tile_rows, _WIDTH), lambda i: (i, 0)),
        compiler_params=pltpu.CompilerParams(
            # Row tiles are independent -> shard across both TCs on v7x.
            dimension_semantics=("parallel",),
        ),
    )(w, slab)

    out_flat = main_out.reshape(-1)
    if rem:
        # < 512-element tail: same f32 math in plain XLA, then stitch.
        tail_out = _forward_xla(flat[main_n:], w, act_type)
        out_flat = jnp.concatenate([out_flat, tail_out])
    return out_flat.reshape(orig_shape)


if __name__ == "__main__":
    key = jax.random.PRNGKey(0)
    k_x, k_w, k_rag = jax.random.split(key, 3)

    # Deterministic weight matching nn.Linear's U(-1/sqrt(fan_in), 1/sqrt(fan_in)),
    # fan_in = 1  ->  U(-1, 1).
    w = jax.random.uniform(k_w, (1, 1), dtype=jnp.float32, minval=-1.0, maxval=1.0)

    ref_act = {
        "adaline": lambda z: z,
        "sigmoid": jax.nn.sigmoid,
        "tanh": jnp.tanh,
    }

    fwd = jax.jit(nn_model_forward, static_argnames="act_type")

    # Main Pallas path: (65536, 1) -> 128 slab rows, 2 grid steps, no padding.
    x = jax.random.normal(k_x, (65536, 1), dtype=jnp.float32)
    for act in ("adaline", "sigmoid", "tanh"):
        y = jax.block_until_ready(fwd(x, w, act_type=act))
        r = ref_act[act](x * w[0, 0])
        assert y.shape == x.shape, f"shape mismatch ({act})"
        assert jnp.allclose(y, r, atol=1e-5), f"mismatch vs reference ({act})"

    # Ragged path: N = 129*512 + 1 -> ragged last row-block + XLA tail, no pad/slice.
    xr = jax.random.normal(k_rag, (66049, 1), dtype=jnp.float32)
    yr = jax.block_until_ready(fwd(xr, w, act_type="tanh"))
    assert jnp.allclose(yr, jnp.tanh(xr * w[0, 0]), atol=1e-5), "mismatch (ragged tanh)"

    # Tiny-batch dispatch path (below the Pallas threshold -> plain XLA fusion).
    xt = x[:16]
    yt = jax.block_until_ready(fwd(xt, w, act_type="sigmoid"))
    assert jnp.allclose(yt, jax.nn.sigmoid(xt * w[0, 0]), atol=1e-5), "mismatch (tiny)"

    print("KERNEL_OK")
</pallas_src>

<mosaic_0001>
module attributes {stable_mosaic.version = 11 : i64} {
  func.func @_nn_model_kernel(%arg0: i32, %arg1: memref<1x1xf32, #tpu.memory_space<smem>>, %arg2: memref<64x512xf32, #tpu.memory_space<vmem>>, %arg3: memref<64x512xf32, #tpu.memory_space<vmem>>) attributes {dimension_semantics = [#tpu.dimension_semantics<parallel>], iteration_bounds = array<i64: 2>, scalar_prefetch = 0 : i64, scratch_operands = 0 : i64, tpu.core_type = #tpu.core_type<tc>, window_params = [{transform_indices = @transform_0, window_bounds = array<i64: 1, 1>}, {transform_indices = @transform_1, window_bounds = array<i64: 64, 512>}, {transform_indices = @transform_2, window_bounds = array<i64: 64, 512>}]} {
    %c0 = arith.constant 0 : index
    %c0_0 = arith.constant 0 : index
    %0 = memref.load %arg1[%c0, %c0_0] : memref<1x1xf32, #tpu.memory_space<smem>>
    %c0_1 = arith.constant 0 : index
    %c0_2 = arith.constant 0 : index
    %1 = vector.load %arg2[%c0_1, %c0_2] : memref<64x512xf32, #tpu.memory_space<vmem>>, vector<64x512xf32>
    %2 = vector.broadcast %0 : f32 to vector<64x512xf32>
    %3 = arith.mulf %1, %2 : vector<64x512xf32>
    %c0_3 = arith.constant 0 : index
    %c0_4 = arith.constant 0 : index
    %4 = vector.load %arg3[%c0_3, %c0_4] : memref<64x512xf32, #tpu.memory_space<vmem>>, vector<64x512xf32>
    tpu.vector_store %arg3[%c0_3, %c0_4], %3 {strides = array<i32>} : memref<64x512xf32, #tpu.memory_space<vmem>>, vector<64x512xf32>,
    return
  }
  func.func @transform_0(%arg0: i32) -> (i32, i32) {
    %c0_i32 = arith.constant 0 : i32
    %c0_i32_0 = arith.constant 0 : i32
    %c0_i32_1 = arith.constant 0 : i32
    return %c0_i32, %c0_i32_0 : i32, i32
  }
  func.func @transform_1(%arg0: i32) -> (i32, i32) {
    %c0_i32 = arith.constant 0 : i32
    %c0_i32_0 = arith.constant 0 : i32
    return %arg0, %c0_i32 : i32, i32
  }
  func.func @transform_2(%arg0: i32) -> (i32, i32) {
    %c0_i32 = arith.constant 0 : i32
    %c0_i32_0 = arith.constant 0 : i32
    return %arg0, %c0_i32 : i32, i32
  }
}

</mosaic_0001>

<llo_original>
// kernel: nn_model_forward.1
$region0: #{nn_model_forward.1}
  #allocation0 [shape = 'u32[]', space=smem, size = 0x4, offset = 0x4, fixed_abs, tag = 'smem constant byte address 0x4 - core index']
  #allocation1 [shape = 'u32[144,128]{1,0:T(1,128)}', space=vmem, size = 0x12000, scoped, tag = 'internal scratch']
  #allocation2 [shape = 'f32[1,1]{1,0:T(1,128)S(6)}', space=smem, size = 0x200, scoped, tag = 'scoped memory for nn_model_forward.1']
  %s0 = inlined_call_operand.<no memory space> [shape: f32[1,1], index: 0, kind: input, shape index: {}]
  %s1 = inlined_call_operand.vmem [shape: f32[128,512], index: 1, kind: input, shape index: {}]
  %s2 = inlined_call_operand.vmem [shape: f32[128,512], index: 2, kind: output, shape index: {}]
  %s3 = sld [smem:[#allocation0]]
  $region41: #{nn_model_forward.1} parent=0
    _
  %s5 = ssub.s32 1, %s3
  %s6 = scalar_select 0, %s5, %s3
  %7 = sst [smem:[#allocation2]] %s0
  loop: start=0, step=1, limit=4
  $region2: #{nn_model_forward.1} parent=0 // loop_pre_header
    _
  $region3: #{nn_model_forward.1} parent=0 // loop_header
    %s9 = sphi 0, %s13
    %p10 = scmp.ge.s32.totalorder %s9, 4
    %s17 = sphi 0, %s17
    %s19 = sphi 0, %s17
    %s20 = sphi 0, %s19
    %s34 = sphi 0, %s20
    %s40 = sphi 0, %s42
    %s43 = sphi 0, %s40
    %s44 = sphi 0, %s43
    %s60 = sphi 0, %s44
    %s66 = sphi 0, %s68
    %s69 = sphi 0, %s66
    %s70 = sphi 0, %s69
    %s86 = sphi 0, %s70
  $region4: #{nn_model_forward.1} parent=0 // loop_header_branch
    %12 = sbr.rel (%p10) target = $region8
  $region5: #{nn_model_forward.1} parent=0 // loop_body
    %s14 = ssub.s32 %s9, 1
    %s15 = ssub.s32 %s9, 2
    %s16 = sadd.s32 %s9, 1
    %s18 = sadd.s32 %s17, 1
    %p21 = scmp.eq.s32.totalorder %s9, 1
    %p22 = scmp.ne.s32.totalorder %s17, %s19
    %p23 = scmp.eq.s32.totalorder %s9, 0
    %p24 = por %p22, %p23
    %p25 = scmp.ne.s32.totalorder %s17, %s19
    %p26 = scmp.eq.s32.totalorder %s14, 1
    %p27 = por %p25, %p26
    %p28 = scmp.ne.s32.totalorder %s19, %s20
    %p29 = scmp.eq.s32.totalorder %s14, 0
    %p30 = por %p28, %p29
    %p31 = scmp.ne.s32.totalorder %s19, %s20
    %p32 = scmp.eq.s32.totalorder %s15, 1
    %p33 = por %p31, %p32
    %p35 = scmp.ne.s32.totalorder %s20, %s34
    %p36 = scmp.eq.s32.totalorder %s15, 0
    %p37 = por %p35, %p36
    %s38 = ssub.s32 %s9, %s16
    %p39 = scmp.eq.s32.totalorder %s38, 0
    %s41 = sadd.s32 %s40, 1
    %s42 = scalar_select %p39, %s40, %s41
    %p45 = pneg %p39
    %p46 = scmp.eq.s32.totalorder %s9, 1
    %p47 = por %p45, %p46
    %p48 = scmp.ne.s32.totalorder %s40, %s43
    %p49 = scmp.eq.s32.totalorder %s9, 0
    %p50 = por %p48, %p49
    %p51 = scmp.ne.s32.totalorder %s40, %s43
    %p52 = scmp.eq.s32.totalorder %s14, 1
    %p53 = por %p51, %p52
    %p54 = scmp.ne.s32.totalorder %s43, %s44
    %p55 = scmp.eq.s32.totalorder %s14, 0
    %p56 = por %p54, %p55
    %p57 = scmp.ne.s32.totalorder %s43, %s44
    %p58 = scmp.eq.s32.totalorder %s15, 1
    %p59 = por %p57, %p58
    %p61 = scmp.ne.s32.totalorder %s44, %s60
    %p62 = scmp.eq.s32.totalorder %s15, 0
    %p63 = por %p61, %p62
    %s64 = ssub.s32 %s9, %s16
    %p65 = scmp.eq.s32.totalorder %s64, 0
    %s67 = sadd.s32 %s66, 1
    %s68 = scalar_select %p65, %s66, %s67
    %p71 = pneg %p65
    %p72 = scmp.eq.s32.totalorder %s9, 1
    %p73 = por %p71, %p72
    %p74 = scmp.ne.s32.totalorder %s66, %s69
    %p75 = scmp.eq.s32.totalorder %s9, 0
    %p76 = por %p74, %p75
    %p77 = scmp.ne.s32.totalorder %s66, %s69
    %p78 = scmp.eq.s32.totalorder %s14, 1
    %p79 = por %p77, %p78
    %p80 = scmp.ne.s32.totalorder %s69, %s70
    %p81 = scmp.eq.s32.totalorder %s14, 0
    %p82 = por %p80, %p81
    %p83 = scmp.ne.s32.totalorder %s69, %s70
    %p84 = scmp.eq.s32.totalorder %s15, 1
    %p85 = por %p83, %p84
    %p87 = scmp.ne.s32.totalorder %s70, %s86
    %p88 = scmp.eq.s32.totalorder %s15, 0
    %p89 = por %p87, %p88
    %p90 = scmp.le.s32.totalorder 1, %s9
    %p91 = scmp.lt.s32.totalorder %s9, 3
    %p92 = pnand %p90, %p91
    %p93 = pneg %p92
    // Predicated region
    $region9: #{nn_model_forward.1} parent=5 // pred_check
      _
    $region10: #{nn_model_forward.1} parent=5 // pred_check_branch
      %95 = sbr.rel (%p92) target = $region12
    $region11: #{nn_model_forward.1} parent=5 // pred_region
      %s96 = ssub.s32 %s9, 1
      // Predicated region
      $region13: #{nn_model_forward.1} parent=11 // pred_check
        %p97 = pneg %p30
      $region14: #{nn_model_forward.1} parent=11 // pred_check_branch
        %99 = sbr.rel (%p97) target = $region16
      $region15: #{nn_model_forward.1} parent=11 // pred_region
        _
      $region16: #{nn_model_forward.1} parent=11 // pred_fallthru
        _
    $region12: #{nn_model_forward.1} parent=5 // pred_fallthru
      _
    %p100 = scmp.lt.s32.totalorder %s9, 2
    // Predicated region
    $region17: #{nn_model_forward.1} parent=5 // pred_check
      %p101 = pneg %p100
    $region18: #{nn_model_forward.1} parent=5 // pred_check_branch
      %103 = sbr.rel (%p101) target = $region20
    $region19: #{nn_model_forward.1} parent=5 // pred_region
      // Predicated region
      $region21: #{nn_model_forward.1} parent=19 // pred_check
        %p104 = pneg %p50
      $region22: #{nn_model_forward.1} parent=19 // pred_check_branch
        %106 = sbr.rel (%p104) target = $region24
      $region23: #{nn_model_forward.1} parent=19 // pred_region
        %s107 = smul.u32 8, %s9
        %p108 = scmp.lt.s32.totalorder %s107, 15
        %s109 = scalar_select %p108, %s107, 15
        %s110 = smul.addr %s109, 4
        %s111 = smul.addr %s110, 8
        %s112 = scalar_lea.vmem %s1, %s111
        %s113 = smul.u32 8, %s9
      $region24: #{nn_model_forward.1} parent=19 // pred_fallthru
        _
    $region20: #{nn_model_forward.1} parent=5 // pred_fallthru
      _
    %p114 = scmp.le.s32.totalorder 1, %s9
    %p115 = scmp.lt.s32.totalorder %s9, 3
    %p116 = pnand %p114, %p115
    %p117 = pneg %p116
    // Predicated region
    $region25: #{nn_model_forward.1} parent=5 // pred_check
      _
    $region26: #{nn_model_forward.1} parent=5 // pred_check_branch
      %119 = sbr.rel (%p116) target = $region28
    $region27: #{nn_model_forward.1} parent=5 // pred_region
      %s120 = ssub.s32 %s9, 1
      %p121 = pneg %p30
      %p122 = pneg %p27
      %s123 = smul.u32 8, %s14
      %p124 = scmp.lt.s32.totalorder %s123, 15
      %s125 = scalar_select %p124, %s123, 15
      %s126 = smul.addr %s125, 4
      %s127 = smul.addr %s126, 8
      %s128 = scalar_lea.vmem %s1, %s127
      %p129 = pneg %p56
      %p130 = pneg %p53
      %p131 = pneg %p82
      %p132 = pneg %p79
      %s133 = smul.u32 8, %s14
      %p134 = scmp.lt.s32.totalorder %s133, 15
      %s135 = scalar_select %p134, %s133, 15
      %s136 = smul.addr %s135, 4
      %s137 = smul.addr %s136, 8
      %s138 = scalar_lea.vmem %s2, %s137
      %s139 = smul.u32 8, %s14
      %p140 = scmp.lt.s32.totalorder %s139, 15
      %s141 = scalar_select %p140, %s139, 15
      %s142 = smul.addr %s141, 4
      %s143 = smul.addr %s142, 8
      %s144 = scalar_lea.vmem %s1, %s143
      %s145 = smul.u32 8, %s14
      %s146 = smul.u32 8, %s14
      %p147 = scmp.lt.s32.totalorder %s146, 15
      %s148 = scalar_select %p147, %s146, 15
      %s149 = smul.addr %s148, 4
      %s150 = smul.addr %s149, 8
      %s151 = scalar_lea.vmem %s2, %s150
      %s152 = smul.u32 8, %s14
      %s153 = sld [smem:[#allocation2]]
      %v154 = vld [vmem:[%s144] sm:$0xff]
      %v155 = vld [vmem:[%s144 + $0x8] sm:$0xff]
      %v156 = vld [vmem:[%s144 + $0x10] sm:$0xff]
      %v157 = vld [vmem:[%s144 + $0x18] sm:$0xff]
      %v158 = vld [vmem:[%s144 + $0x20] sm:$0xff]
      %v159 = vld [vmem:[%s144 + $0x28] sm:$0xff]
      %v160 = vld [vmem:[%s144 + $0x30] sm:$0xff]
      %v161 = vld [vmem:[%s144 + $0x38] sm:$0xff]
      %v162 = vld [vmem:[%s144 + $0x40] sm:$0xff]
      %v163 = vld [vmem:[%s144 + $0x48] sm:$0xff]
      %v164 = vld [vmem:[%s144 + $0x50] sm:$0xff]
      %v165 = vld [vmem:[%s144 + $0x58] sm:$0xff]
      %v166 = vld [vmem:[%s144 + $0x60] sm:$0xff]
      %v167 = vld [vmem:[%s144 + $0x68] sm:$0xff]
      %v168 = vld [vmem:[%s144 + $0x70] sm:$0xff]
      %v169 = vld [vmem:[%s144 + $0x78] sm:$0xff]
      %v170 = vld [vmem:[%s144 + $0x80] sm:$0xff]
      %v171 = vld [vmem:[%s144 + $0x88] sm:$0xff]
      %v172 = vld [vmem:[%s144 + $0x90] sm:$0xff]
      %v173 = vld [vmem:[%s144 + $0x98] sm:$0xff]
      %v174 = vld [vmem:[%s144 + $0xa0] sm:$0xff]
      %v175 = vld [vmem:[%s144 + $0xa8] sm:$0xff]
      %v176 = vld [vmem:[%s144 + $0xb0] sm:$0xff]
      %v177 = vld [vmem:[%s144 + $0xb8] sm:$0xff]
      %v178 = vld [vmem:[%s144 + $0xc0] sm:$0xff]
      %v179 = vld [vmem:[%s144 + $0xc8] sm:$0xff]
      %v180 = vld [vmem:[%s144 + $0xd0] sm:$0xff]
      %v181 = vld [vmem:[%s144 + $0xd8] sm:$0xff]
      %v182 = vld [vmem:[%s144 + $0xe0] sm:$0xff]
      %v183 = vld [vmem:[%s144 + $0xe8] sm:$0xff]
      %v184 = vld [vmem:[%s144 + $0xf0] sm:$0xff]
      %v185 = vld [vmem:[%s144 + $0xf8] sm:$0xff]
      %v186 = vstv %s153
      %v187 = vmul.f32 %v154, %v186
      %v188 = vmul.f32 %v155, %v186
      %v189 = vmul.f32 %v156, %v186
      %v190 = vmul.f32 %v157, %v186
      %v191 = vmul.f32 %v158, %v186
      %v192 = vmul.f32 %v159, %v186
      %v193 = vmul.f32 %v160, %v186
      %v194 = vmul.f32 %v161, %v186
      %v195 = vmul.f32 %v162, %v186
      %v196 = vmul.f32 %v163, %v186
      %v197 = vmul.f32 %v164, %v186
      %v198 = vmul.f32 %v165, %v186
      %v199 = vmul.f32 %v166, %v186
      %v200 = vmul.f32 %v167, %v186
      %v201 = vmul.f32 %v168, %v186
      %v202 = vmul.f32 %v169, %v186
      %v203 = vmul.f32 %v170, %v186
      %v204 = vmul.f32 %v171, %v186
      %v205 = vmul.f32 %v172, %v186
      %v206 = vmul.f32 %v173, %v186
      %v207 = vmul.f32 %v174, %v186
      %v208 = vmul.f32 %v175, %v186
      %v209 = vmul.f32 %v176, %v186
      %v210 = vmul.f32 %v177, %v186
      %v211 = vmul.f32 %v178, %v186
      %v212 = vmul.f32 %v179, %v186
      %v213 = vmul.f32 %v180, %v186
      %v214 = vmul.f32 %v181, %v186
      %v215 = vmul.f32 %v182, %v186
      %v216 = vmul.f32 %v183, %v186
      %v217 = vmul.f32 %v184, %v186
      %v218 = vmul.f32 %v185, %v186
      %219 = vst [vmem:[%s151] sm:$0xff] %v187
      %220 = vst [vmem:[%s151 + $0x8] sm:$0xff] %v188
      %221 = vst [vmem:[%s151 + $0x10] sm:$0xff] %v189
      %222 = vst [vmem:[%s151 + $0x18] sm:$0xff] %v190
      %223 = vst [vmem:[%s151 + $0x20] sm:$0xff] %v191
      %224 = vst [vmem:[%s151 + $0x28] sm:$0xff] %v192
      %225 = vst [vmem:[%s151 + $0x30] sm:$0xff] %v193
      %226 = vst [vmem:[%s151 + $0x38] sm:$0xff] %v194
      %227 = vst [vmem:[%s151 + $0x40] sm:$0xff] %v195
      %228 = vst [vmem:[%s151 + $0x48] sm:$0xff] %v196
      %229 = vst [vmem:[%s151 + $0x50] sm:$0xff] %v197
      %230 = vst [vmem:[%s151 + $0x58] sm:$0xff] %v198
      %231 = vst [vmem:[%s151 + $0x60] sm:$0xff] %v199
      %232 = vst [vmem:[%s151 + $0x68] sm:$0xff] %v200
      %233 = vst [vmem:[%s151 + $0x70] sm:$0xff] %v201
      %234 = vst [vmem:[%s151 + $0x78] sm:$0xff] %v202
      %235 = vst [vmem:[%s151 + $0x80] sm:$0xff] %v203
      %236 = vst [vmem:[%s151 + $0x88] sm:$0xff] %v204
      %237 = vst [vmem:[%s151 + $0x90] sm:$0xff] %v205
      %238 = vst [vmem:[%s151 + $0x98] sm:$0xff] %v206
      %239 = vst [vmem:[%s151 + $0xa0] sm:$0xff] %v207
      %240 = vst [vmem:[%s151 + $0xa8] sm:$0xff] %v208
      %241 = vst [vmem:[%s151 + $0xb0] sm:$0xff] %v209
      %242 = vst [vmem:[%s151 + $0xb8] sm:$0xff] %v210
      %243 = vst [vmem:[%s151 + $0xc0] sm:$0xff] %v211
      %244 = vst [vmem:[%s151 + $0xc8] sm:$0xff] %v212
      %245 = vst [vmem:[%s151 + $0xd0] sm:$0xff] %v213
      %246 = vst [vmem:[%s151 + $0xd8] sm:$0xff] %v214
      %247 = vst [vmem:[%s151 + $0xe0] sm:$0xff] %v215
      %248 = vst [vmem:[%s151 + $0xe8] sm:$0xff] %v216
      %249 = vst [vmem:[%s151 + $0xf0] sm:$0xff] %v217
      %250 = vst [vmem:[%s151 + $0xf8] sm:$0xff] %v218
      %s251 = smul.u32 8, %s14
      %p252 = scmp.lt.s32.totalorder %s251, 15
      %s253 = scalar_select %p252, %s251, 15
      %s254 = smul.addr %s253, 4
      %s255 = smul.addr %s254, 8
      %s256 = scalar_lea.vmem %s2, %s255
      // Predicated region
      $region29: #{nn_model_forward.1} parent=27 // pred_check
        %p257 = pneg %p79
      $region30: #{nn_model_forward.1} parent=27 // pred_check_branch
        %259 = sbr.rel (%p257) target = $region32
      $region31: #{nn_model_forward.1} parent=27 // pred_region
        %s260 = smul.u32 8, %s14
      $region32: #{nn_model_forward.1} parent=27 // pred_fallthru
        _
    $region28: #{nn_model_forward.1} parent=5 // pred_fallthru
      _
    %p261 = scmp.le.s32.totalorder 2, %s9
    // Predicated region
    $region33: #{nn_model_forward.1} parent=5 // pred_check
      %p262 = pneg %p261
    $region34: #{nn_model_forward.1} parent=5 // pred_check_branch
      %264 = sbr.rel (%p262) target = $region36
    $region35: #{nn_model_forward.1} parent=5 // pred_region
      %s265 = ssub.s32 %s9, 2
      // Predicated region
      $region37: #{nn_model_forward.1} parent=35 // pred_check
        %p266 = pneg %p85
      $region38: #{nn_model_forward.1} parent=35 // pred_check_branch
        %268 = sbr.rel (%p266) target = $region40
      $region39: #{nn_model_forward.1} parent=35 // pred_region
        %s269 = smul.u32 8, %s15
        %p270 = scmp.lt.s32.totalorder %s269, 15
        %s271 = scalar_select %p270, %s269, 15
        %s272 = smul.addr %s271, 4
        %s273 = smul.addr %s272, 8
        %s274 = scalar_lea.vmem %s2, %s273
      $region40: #{nn_model_forward.1} parent=35 // pred_fallthru
        _
    $region36: #{nn_model_forward.1} parent=5 // pred_fallthru
      _
  $region6: #{nn_model_forward.1} parent=0 // loop_footer
    %s13 = sadd.s32 1, %s9
  $region7: #{nn_model_forward.1} parent=0 // loop_footer_branch
    %8 = sbr.rel target = $region3
  $region8: #{nn_model_forward.1} parent=0 // loop_exit
    _

</llo_original>
